<compile_context>
chip_gen: v5e
topology: v5e:2x2
jax: 0.10.0
libtpu: 0.0.40
codegen_flags: <defaults>
</compile_context>

<pallas_src>
import functools

import jax
import jax.numpy as jnp
from jax.experimental import pallas as pl
from jax.experimental.pallas import tpu as pltpu

_LANE = 128
_MAX_COLS = 4096
_TILE_BYTES = 2 * 1024 * 1024  # ~2 MiB/tile; x (in+out) x double-buffer = 8 MiB VMEM


def _flatten_new_shape(shape, start_dim, end_dim):
    """Target shape, exactly mirroring the PyTorch module's bookkeeping."""
    ndim = len(shape)
    start = start_dim if start_dim >= 0 else ndim + start_dim
    end = end_dim if end_dim >= 0 else ndim + end_dim
    if not (0 <= start < ndim) or not (0 <= end < ndim):
        raise ValueError(
            f"flatten dims out of range for shape {shape}: "
            f"start_dim={start_dim}, end_dim={end_dim}")
    if start > end:
        raise ValueError("flatten: start_dim must be <= end_dim")
    middle = functools.reduce(lambda a, b: a * b, shape[start:end + 1], 1)
    return shape[:start] + (middle,) + shape[end + 1:]


def _slab_shape(total, sublane):
    """Pick a lane/sublane-dense (rows, cols, padded_total) 2D view.

    Prefers cols = large multiple of 128 with rows a multiple of `sublane`
    (unmasked full-vreg vld/vst).  Falls back to zero-padding up to the next
    (sublane, 128)-aligned slab for awkward element counts.
    """
    for need_row_align in (True, False):
        for cols in range(_MAX_COLS, 0, -_LANE):
            if total % cols:
                continue
            rows = total // cols
            if need_row_align and rows % sublane:
                continue
            return rows, cols, total
    cols = _LANE
    rows = pl.cdiv(total, sublane * cols) * sublane
    return rows, cols, rows * cols


def _pick_tile_rows(rows, cols, itemsize, sublane):
    """Rows per tile: ~_TILE_BYTES, multiple of `sublane`, ideally dividing rows."""
    budget = max(sublane, (_TILE_BYTES // max(cols * itemsize, 1)) // sublane * sublane)
    if rows <= budget:
        return rows  # full-extent block (always legal)
    t = budget
    while t >= sublane:
        if rows % t == 0:
            return t
        t -= sublane
    return budget  # uneven grid: Pallas masks the ragged last block


def _copy_kernel(x_ref, o_ref):
    # Identity copy of one (tm, cols) tile; the work is the pipelined DMA.
    o_ref[...] = x_ref[...]


def _pallas_copy_2d(x2d):
    rows, cols = x2d.shape
    itemsize = x2d.dtype.itemsize
    sublane = max(8, 32 // itemsize)  # 8 for f32, 16 for bf16, 32 for int8
    tm = _pick_tile_rows(rows, cols, itemsize, sublane)
    grid_m = pl.cdiv(rows, tm)
    return pl.pallas_call(
        _copy_kernel,
        out_shape=jax.ShapeDtypeStruct((rows, cols), x2d.dtype),
        grid_spec=pltpu.PrefetchScalarGridSpec(
            num_scalar_prefetch=0,
            grid=(grid_m,),
            in_specs=[pl.BlockSpec((tm, cols), lambda i: (i, 0))],
            out_specs=pl.BlockSpec((tm, cols), lambda i: (i, 0)),
        ),
        compiler_params=pltpu.CompilerParams(
            dimension_semantics=("parallel",)),  # shards across TCs on v7x
        input_output_aliases={0: 0},  # donate input buffer when possible
    )(x2d)


def pallas_flatten(x: jax.Array, start_dim: int = 1, end_dim: int = -1,
                   *, copy: bool = False) -> jax.Array:
    """Equivalent of torch.nn.Flatten(start_dim, end_dim).

    copy=False (default): pure metadata reshape, no kernel, no HBM traffic.
    copy=True: materialize a fresh buffer via the tiled Pallas copy kernel.
    """
    new_shape = _flatten_new_shape(x.shape, start_dim, end_dim)
    if not copy or x.size == 0:
        # Flatten of a contiguous tensor is free; don't launch a kernel.
        return jnp.reshape(x, new_shape)

    total = int(x.size)
    sublane = max(8, 32 // x.dtype.itemsize)
    rows, cols, padded = _slab_shape(total, sublane)

    flat = jnp.reshape(x, (-1,))
    if padded != total:
        flat = jnp.pad(flat, (0, padded - total))
    out2d = _pallas_copy_2d(jnp.reshape(flat, (rows, cols)))
    out_flat = jnp.reshape(out2d, (-1,))
    if padded != total:
        out_flat = out_flat[:total]
    return jnp.reshape(out_flat, new_shape)


if __name__ == "__main__":
    key = jax.random.PRNGKey(0)
    key, key_y = jax.random.split(key)

    # Small NCHW input, consistent with conv-stack -> Flatten usage.
    x = jax.random.normal(key, (2, 4, 16, 16), dtype=jnp.float32)

    # Default (zero-cost) path: metadata reshape only.
    out_view = pallas_flatten(x)
    # Explicit-copy path: runs the tiled Pallas copy kernel
    # (slab chosen here: rows=8, cols=256 -> one (8, 256) block).
    out_copy = jax.block_until_ready(pallas_flatten(x, copy=True))

    expected = jnp.reshape(x, (2, 4 * 16 * 16))
    assert out_view.shape == (2, 1024) and out_copy.shape == (2, 1024)
    assert out_copy.dtype == x.dtype
    assert bool(jnp.array_equal(out_view, expected))
    assert bool(jnp.array_equal(out_copy, expected))

    # Awkward (non-128-divisible) element count + non-default start/end dims:
    # exercises the padded-slab fallback path of the copy kernel.
    y = jax.random.normal(key_y, (2, 3, 17, 17), dtype=jnp.float32)
    out_y = jax.block_until_ready(
        pallas_flatten(y, start_dim=1, end_dim=2, copy=True))
    assert out_y.shape == (2, 51, 17)
    assert bool(jnp.array_equal(out_y, jnp.reshape(y, (2, 51, 17))))

    print("KERNEL_OK")
</pallas_src>

<mosaic_0001>
module attributes {stable_mosaic.version = 11 : i64} {
  func.func @_copy_kernel(%arg0: i32, %arg1: memref<8x256xf32, #tpu.memory_space<vmem>>, %arg2: memref<8x256xf32, #tpu.memory_space<vmem>>) attributes {dimension_semantics = [#tpu.dimension_semantics<parallel>], iteration_bounds = array<i64: 1>, scalar_prefetch = 0 : i64, scratch_operands = 0 : i64, tpu.core_type = #tpu.core_type<tc>, window_params = [{transform_indices = @transform_0, window_bounds = array<i64: 8, 256>}, {transform_indices = @transform_1, window_bounds = array<i64: 8, 256>}]} {
    %c0 = arith.constant 0 : index
    %c0_0 = arith.constant 0 : index
    %0 = vector.load %arg1[%c0, %c0_0] : memref<8x256xf32, #tpu.memory_space<vmem>>, vector<8x256xf32>
    %c0_1 = arith.constant 0 : index
    %c0_2 = arith.constant 0 : index
    %1 = vector.load %arg2[%c0_1, %c0_2] : memref<8x256xf32, #tpu.memory_space<vmem>>, vector<8x256xf32>
    tpu.vector_store %arg2[%c0_1, %c0_2], %0 {strides = array<i32>} : memref<8x256xf32, #tpu.memory_space<vmem>>, vector<8x256xf32>,
    return
  }
  func.func @transform_0(%arg0: i32) -> (i32, i32) {
    %c0_i32 = arith.constant 0 : i32
    %c0_i32_0 = arith.constant 0 : i32
    return %arg0, %c0_i32 : i32, i32
  }
  func.func @transform_1(%arg0: i32) -> (i32, i32) {
    %c0_i32 = arith.constant 0 : i32
    %c0_i32_0 = arith.constant 0 : i32
    return %arg0, %c0_i32 : i32, i32
  }
}

</mosaic_0001>

<llo_original>
// kernel: tpu_custom_call.1
$region0: #{tpu_custom_call.1}
  #allocation0 [shape = 'u32[]', space=smem, size = 0x4, offset = 0x4, fixed_abs, tag = 'smem constant byte address 0x4 - core index']
  #allocation1 [shape = 'u32[72,128]{1,0:T(1,128)}', space=vmem, size = 0x9000, scoped, tag = 'internal scratch']
  %s0 = inlined_call_operand.hbm [shape: f32[8,256], index: 0, kind: input, shape index: {}, may-alias: {0,1}]
  %s1 = inlined_call_operand.hbm [shape: f32[8,256], index: 1, kind: output, shape index: {}, may-alias: {0,1}]
  %s2 = sld [smem:[#allocation0]]
  $region18: #{tpu_custom_call.1} parent=0
    _
  %s4 = ssub.s32 1, %s2
  %s5 = scalar_select 0, %s4, %s2
  $region1: #{tpu_custom_call.1} parent=0
    #allocation2 [shape = 'u8[8192]{0}', space=vmem, size = 0x2000, scoped, tag = 'input window, operand 0, single buffered']
    #allocation3 [shape = 's32[1]{0}', space=sflag, size = 0x4, scoped, tag = 'scoped memory for tpu_custom_call.1']
    #allocation4 [shape = 's32[1]{0}', space=sflag, size = 0x4, scoped, tag = 'scoped memory for tpu_custom_call.1']
    #allocation5 [shape = 'u8[8192]{0}', space=vmem, size = 0x2000, scoped, tag = 'output window, operand 0, single buffered']
    %6 = vsyncpa [#allocation3], 0
    %7 = vsyncpa [#allocation4], 0
    // Predicated region
    $region2: #{tpu_custom_call.1} parent=1 // pred_check
      _
    $region3: #{tpu_custom_call.1} parent=1 // pred_check_branch
      %9 = sbr.rel (0) target = $region5
    $region4: #{tpu_custom_call.1} parent=1 // pred_region
      %11 = vsyncadd [#allocation3], 0
      %s13 = sshll.u32 %s0, 4
      %s14 = int_to_ptr.hbm [resolvable:$true] %s13
      %s15 = sshll.u32 [#allocation2], 4
      %s16 = int_to_ptr.vmem [resolvable:$true] %s15
      %18 = dma.hbm_to_vmem [thread:$0]  %s14, 256, %s16, [#allocation3]
    $region5: #{tpu_custom_call.1} parent=1 // pred_fallthru
      _
    // Predicated region
    $region6: #{tpu_custom_call.1} parent=1 // pred_check
      _
    $region7: #{tpu_custom_call.1} parent=1 // pred_check_branch
      %20 = sbr.rel (0) target = $region9
    $region8: #{tpu_custom_call.1} parent=1 // pred_region
      %22 = dma.done [#allocation3], 256
    $region9: #{tpu_custom_call.1} parent=1 // pred_fallthru
      _
    %v23 = vld [vmem:[#allocation2] sm:$0xff]
    %v24 = vld [vmem:[#allocation2 + $0x8] sm:$0xff]
    %25 = vst [vmem:[#allocation5] sm:$0xff] %v23
    %26 = vst [vmem:[#allocation5 + $0x8] sm:$0xff] %v24
    // Predicated region
    $region10: #{tpu_custom_call.1} parent=1 // pred_check
      _
    $region11: #{tpu_custom_call.1} parent=1 // pred_check_branch
      %28 = sbr.rel (0) target = $region13
    $region12: #{tpu_custom_call.1} parent=1 // pred_region
      %30 = vsyncadd [#allocation4], 0
      %s32 = sshll.u32 [#allocation5], 4
      %s33 = int_to_ptr.vmem [resolvable:$true] %s32
      %s34 = sshll.u32 %s1, 4
      %s35 = int_to_ptr.hbm [resolvable:$true] %s34
      %37 = dma.vmem_to_hbm [thread:$0]  %s33, 256, %s35, [#allocation4]
    $region13: #{tpu_custom_call.1} parent=1 // pred_fallthru
      _
    // Predicated region
    $region14: #{tpu_custom_call.1} parent=1 // pred_check
      _
    $region15: #{tpu_custom_call.1} parent=1 // pred_check_branch
      %39 = sbr.rel (0) target = $region17
    $region16: #{tpu_custom_call.1} parent=1 // pred_region
      %41 = dma.done [#allocation4], 256
    $region17: #{tpu_custom_call.1} parent=1 // pred_fallthru
      _
    %42 = vsyncpa [#allocation3], 1
    %43 = vsyncpa [#allocation4], 1

</llo_original>
